<compile_context>
chip_gen: v5e
topology: v5e:2x2
jax: 0.10.0
libtpu: 0.0.40
codegen_flags: <defaults>
</compile_context>

<pallas_src>
import jax
import jax.numpy as jnp
from jax.experimental import pallas as pl
from jax.experimental.pallas import tpu as pltpu

# ---------------- problem sizes (small, consistent with the forward) -------
B = 2          # batch
S = 8          # sequence length per chain
D = 32         # embedding dim
H = 32         # MLP hidden dim
VOCAB = 20     # amino-acid vocab
NCHAIN = 4     # number of chain ids

NV = VOCAB + NCHAIN        # 24: merged token+chain id space per chain
NFEAT = 2 * NV             # 48: wt + mut merged id space
IDS_W = 4 * S              # packed id row width

TILE_B = 8                 # batch rows per grid step (one sublane group)
OUT_LANES = 128            # lane-dense output slab width
INV_S = 1.0 / S


# ---------------- Pallas kernel --------------------------------------------
def combined_kernel(ids_ref, a_ref, w2_row_ref, out_ref):
    # ids_ref: [TILE_B, 4*S] int32, values already offset into [0, NFEAT).
    # The embedding gather + mean-pool + first Linear are linear, so they were
    # folded at trace time into a_ref ([NFEAT, H], includes the 1/S scale and
    # b1).  Here we only build the per-row id histogram and do ONE matmul.
    ids = ids_ref[...]                                            # [TILE_B, 4S]
    iota = jax.lax.broadcasted_iota(jnp.int32, (TILE_B, IDS_W, NFEAT), 2)
    hist = jnp.sum(jnp.where(ids[:, :, None] == iota, 1.0, 0.0),
                   axis=1)                                        # [TILE_B, 48]

    h = jnp.dot(hist, a_ref[...], preferred_element_type=jnp.float32)
    h = jnp.maximum(h, 0.0)                                       # [TILE_B, H]

    # Second Linear (H -> 1) as VPU multiply + lane reduce (no 1-wide MXU tile).
    # b2 is added in the wrapper (post-ReLU, cannot be folded into A).
    y = jnp.sum(h * w2_row_ref[...], axis=-1, keepdims=True)      # [TILE_B, 1]

    # Lane-dense store; wrapper slices column 0.
    out_ref[...] = jnp.broadcast_to(y, (TILE_B, OUT_LANES)).astype(out_ref.dtype)


# ---------------- wrapper ----------------------------------------------------
def combined_model(wt_chains, wt_chain_ids, mut_chains, mut_chain_ids, params):
    """Forward pass matching CombinedModel.forward semantics."""
    b = wt_chains.shape[0]
    b_pad = ((b + TILE_B - 1) // TILE_B) * TILE_B
    pad = b_pad - b

    # Pack the four id arrays into ONE [b, 4*S] int32 array, each source
    # offset into a disjoint range of the merged 0..47 id space:
    #   wt tokens   -> [0, 20)      wt chain ids  -> [20, 24)
    #   mut tokens  -> [24, 44)     mut chain ids -> [44, 48)
    ids = jnp.concatenate(
        [wt_chains.astype(jnp.int32),
         wt_chain_ids.astype(jnp.int32) + VOCAB,
         mut_chains.astype(jnp.int32) + NV,
         mut_chain_ids.astype(jnp.int32) + NV + VOCAB],
        axis=-1)
    if pad:
        ids = jnp.pad(ids, ((0, pad), (0, 0)))

    # Trace-time weight folding (the prefix is linear):
    #   mean_s(tok_emb[t] + chain_emb[c]) @ w1_half == (hist @ A_half)
    # with A_half = concat([tok_emb; chain_emb]) @ w1_half * (1/S).
    emb_cat = jnp.concatenate([params["tok_emb"], params["chain_emb"]], axis=0)
    a_mat = jnp.concatenate(
        [emb_cat @ params["w1"][:D],            # wt half  -> rows [0, 24)
         emb_cat @ params["w1"][D:]],           # mut half -> rows [24, 48)
        axis=0) * INV_S                          # [48, H]
    # Every row's histogram sums to exactly 4*S (one count per id slot), so b1
    # folds into A as a constant per-column shift.
    a_mat = a_mat + params["b1"] / (4.0 * S)

    w2_row = params["w2"].T                      # [1, H]

    grid = (b_pad // TILE_B,)
    out = pl.pallas_call(
        combined_kernel,
        out_shape=jax.ShapeDtypeStruct((b_pad, OUT_LANES), jnp.float32),
        grid=grid,
        in_specs=[
            pl.BlockSpec((TILE_B, IDS_W), lambda i: (i, 0)),     # packed ids
            pl.BlockSpec((NFEAT, H), lambda i: (0, 0)),          # fused A (+b1)
            pl.BlockSpec((1, H), lambda i: (0, 0)),              # w2.T row
        ],
        out_specs=pl.BlockSpec((TILE_B, OUT_LANES), lambda i: (i, 0)),
        compiler_params=pltpu.CompilerParams(
            # batch axis is independent -> shards across v7x's two TCs once
            # the grid has >=2 steps; no-op on single-TC v5e/v6e.
            dimension_semantics=("parallel",)),
    )(ids, a_mat, w2_row)

    # Slice the valid rows / lane 0 and add the post-ReLU bias.
    return out[:b, :1] + params["b2"]


# ---------------- deterministic parameter init ------------------------------
def init_params(key):
    k = jax.random.split(key, 6)
    return {
        "tok_emb": jax.random.normal(k[0], (VOCAB, D), jnp.float32) * 0.1,
        "chain_emb": jax.random.normal(k[1], (NCHAIN, D), jnp.float32) * 0.1,
        "w1": jax.random.normal(k[2], (2 * D, H), jnp.float32) * 0.1,
        "b1": jnp.zeros((1, H), jnp.float32),
        "w2": jax.random.normal(k[3], (H, 1), jnp.float32) * 0.1,
        "b2": jnp.zeros((1, 1), jnp.float32),
    }


if __name__ == "__main__":
    key = jax.random.PRNGKey(0)
    kp, k1, k2, k3, k4 = jax.random.split(key, 5)

    params = init_params(kp)

    wt_chains = jax.random.randint(k1, (B, S), 0, VOCAB, jnp.int32)
    wt_chain_ids = jax.random.randint(k2, (B, S), 0, NCHAIN, jnp.int32)
    mut_chains = jax.random.randint(k3, (B, S), 0, VOCAB, jnp.int32)
    mut_chain_ids = jax.random.randint(k4, (B, S), 0, NCHAIN, jnp.int32)

    out = combined_model(wt_chains, wt_chain_ids, mut_chains, mut_chain_ids,
                         params)
    out = jax.block_until_ready(out)

    # pure-JAX reference (original gather + concat formulation)
    tok_emb, chain_emb = params["tok_emb"], params["chain_emb"]
    wt_e = tok_emb[wt_chains] + chain_emb[wt_chain_ids]
    mut_e = tok_emb[mut_chains] + chain_emb[mut_chain_ids]
    feat = jnp.concatenate([wt_e.mean(1), mut_e.mean(1)], axis=-1)
    ref = jnp.maximum(feat @ params["w1"] + params["b1"], 0.0) @ params["w2"] \
          + params["b2"]
    # tolerance accounts for the trace-time refactoring (emb@w1 precompute,
    # histogram formulation) changing the f32 contraction order on the MXU.
    assert out.shape == (B, 1)
    assert jnp.allclose(out, ref, atol=1e-3, rtol=1e-3), (out, ref)

    print("KERNEL_OK")
</pallas_src>

<mosaic_0001>
module attributes {stable_mosaic.version = 11 : i64} {
  func.func @combined_kernel(%arg0: i32, %arg1: memref<8x32xi32, #tpu.memory_space<vmem>>, %arg2: memref<48x32xf32, #tpu.memory_space<vmem>>, %arg3: memref<1x32xf32, #tpu.memory_space<vmem>>, %arg4: memref<8x128xf32, #tpu.memory_space<vmem>>) attributes {dimension_semantics = [#tpu.dimension_semantics<parallel>], iteration_bounds = array<i64: 1>, scalar_prefetch = 0 : i64, scratch_operands = 0 : i64, tpu.core_type = #tpu.core_type<tc>, window_params = [{transform_indices = @transform_0, window_bounds = array<i64: 8, 32>}, {pipeline_mode = #tpu.pipeline_mode<synchronous>, transform_indices = @transform_1, window_bounds = array<i64: 48, 32>}, {pipeline_mode = #tpu.pipeline_mode<synchronous>, transform_indices = @transform_2, window_bounds = array<i64: 1, 32>}, {transform_indices = @transform_3, window_bounds = array<i64: 8, 128>}]} {
    %c0 = arith.constant 0 : index
    %c0_0 = arith.constant 0 : index
    %0 = vector.load %arg1[%c0, %c0_0] : memref<8x32xi32, #tpu.memory_space<vmem>>, vector<8x32xi32>
    %1 = tpu.iota {dimensions = array<i32: 2>} : vector<8x32x48xi32>
    %2 = vector.shape_cast %0 : vector<8x32xi32> to vector<8x32x1xi32>
    %3 = vector.broadcast %2 : vector<8x32x1xi32> to vector<8x32x48xi32>
    %4 = arith.cmpi eq, %3, %1 : vector<8x32x48xi32>
    %cst = arith.constant 1.000000e+00 : f32
    %cst_1 = arith.constant 0.000000e+00 : f32
    %5 = vector.broadcast %cst : f32 to vector<8x32x48xf32>
    %6 = vector.broadcast %cst_1 : f32 to vector<8x32x48xf32>
    %7 = arith.select %4, %5, %6 : vector<8x32x48xi1>, vector<8x32x48xf32>
    %cst_2 = arith.constant dense<0.000000e+00> : vector<8x48xf32>
    %8 = vector.multi_reduction <add>, %7, %cst_2 [1] : vector<8x32x48xf32> to vector<8x48xf32>
    %c0_3 = arith.constant 0 : index
    %c0_4 = arith.constant 0 : index
    %9 = vector.load %arg2[%c0_3, %c0_4] : memref<48x32xf32, #tpu.memory_space<vmem>>, vector<48x32xf32>
    %cst_5 = arith.constant dense<0.000000e+00> : vector<8x32xf32>
    %10 = tpu.matmul %8, %9, %cst_5 {dimension_numbers = #tpu.dot_dimension_numbers<[1], [0], [0], [1], [0, 0, 1, 1], [], []>} : vector<8x48xf32>, vector<48x32xf32>, vector<8x32xf32> -> vector<8x32xf32>
    %cst_6 = arith.constant 0.000000e+00 : f32
    %11 = vector.broadcast %cst_6 : f32 to vector<8x32xf32>
    %12 = arith.maximumf %10, %11 : vector<8x32xf32>
    %c0_7 = arith.constant 0 : index
    %c0_8 = arith.constant 0 : index
    %13 = vector.load %arg3[%c0_7, %c0_8] : memref<1x32xf32, #tpu.memory_space<vmem>>, vector<1x32xf32>
    %14 = vector.broadcast %13 : vector<1x32xf32> to vector<8x32xf32>
    %15 = arith.mulf %12, %14 : vector<8x32xf32>
    %cst_9 = arith.constant dense<0.000000e+00> : vector<8xf32>
    %16 = vector.multi_reduction <add>, %15, %cst_9 [1] : vector<8x32xf32> to vector<8xf32>
    %17 = vector.shape_cast %16 : vector<8xf32> to vector<8x1xf32>
    %18 = vector.shape_cast %17 : vector<8x1xf32> to vector<8x1xf32>
    %19 = vector.broadcast %18 : vector<8x1xf32> to vector<8x128xf32>
    %c0_10 = arith.constant 0 : index
    %c0_11 = arith.constant 0 : index
    %20 = vector.load %arg4[%c0_10, %c0_11] : memref<8x128xf32, #tpu.memory_space<vmem>>, vector<8x128xf32>
    tpu.vector_store %arg4[%c0_10, %c0_11], %19 {strides = array<i32>} : memref<8x128xf32, #tpu.memory_space<vmem>>, vector<8x128xf32>,
    return
  }
  func.func @transform_0(%arg0: i32) -> (i32, i32) {
    %c0_i32 = arith.constant 0 : i32
    %c0_i32_0 = arith.constant 0 : i32
    return %arg0, %c0_i32 : i32, i32
  }
  func.func @transform_1(%arg0: i32) -> (i32, i32) {
    %c0_i32 = arith.constant 0 : i32
    %c0_i32_0 = arith.constant 0 : i32
    %c0_i32_1 = arith.constant 0 : i32
    return %c0_i32, %c0_i32_0 : i32, i32
  }
  func.func @transform_2(%arg0: i32) -> (i32, i32) {
    %c0_i32 = arith.constant 0 : i32
    %c0_i32_0 = arith.constant 0 : i32
    %c0_i32_1 = arith.constant 0 : i32
    return %c0_i32, %c0_i32_0 : i32, i32
  }
  func.func @transform_3(%arg0: i32) -> (i32, i32) {
    %c0_i32 = arith.constant 0 : i32
    %c0_i32_0 = arith.constant 0 : i32
    return %arg0, %c0_i32 : i32, i32
  }
}

</mosaic_0001>

<llo_original>
// kernel: tpu_custom_call.1
$region0: #{tpu_custom_call.1}
  #allocation0 [shape = 'u32[]', space=smem, size = 0x4, offset = 0x4, fixed_abs, tag = 'smem constant byte address 0x4 - core index']
  #allocation1 [shape = 'u32[72,128]{1,0:T(1,128)}', space=vmem, size = 0x9000, scoped, tag = 'internal scratch']
  %s0 = inlined_call_operand.vmem [shape: s32[8,32], index: 0, kind: input, shape index: {}]
  %s1 = inlined_call_operand.vmem [shape: f32[48,32], index: 1, kind: input, shape index: {}]
  %s2 = inlined_call_operand.vmem [shape: f32[1,32], index: 2, kind: input, shape index: {}]
  %s3 = inlined_call_operand.hbm [shape: f32[8,128], index: 3, kind: output, shape index: {}]
  %s4 = sld [smem:[#allocation0]]
  $region22: #{tpu_custom_call.1} parent=0
    _
  %s6 = ssub.s32 1, %s4
  %s7 = scalar_select 0, %s6, %s4
  $region1: #{tpu_custom_call.1} parent=0
    #allocation2 [shape = 'u8[4096]{0}', space=vmem, size = 0x1000, scoped, tag = 'output window, operand 0, single buffered']
    #allocation3 [shape = 's32[1]{0}', space=sflag, size = 0x4, scoped, tag = 'scoped memory for tpu_custom_call.1']
    %8 = vsyncpa [#allocation3], 0
    // Predicated region
    $region2: #{tpu_custom_call.1} parent=1 // pred_check
      _
    $region3: #{tpu_custom_call.1} parent=1 // pred_check_branch
      %10 = sbr.rel (0) target = $region5
    $region4: #{tpu_custom_call.1} parent=1 // pred_region
      _
    $region5: #{tpu_custom_call.1} parent=1 // pred_fallthru
      _
    // Predicated region
    $region6: #{tpu_custom_call.1} parent=1 // pred_check
      _
    $region7: #{tpu_custom_call.1} parent=1 // pred_check_branch
      %12 = sbr.rel (0) target = $region9
    $region8: #{tpu_custom_call.1} parent=1 // pred_region
      _
    $region9: #{tpu_custom_call.1} parent=1 // pred_fallthru
      _
    // Predicated region
    $region10: #{tpu_custom_call.1} parent=1 // pred_check
      _
    $region11: #{tpu_custom_call.1} parent=1 // pred_check_branch
      %14 = sbr.rel (0) target = $region13
    $region12: #{tpu_custom_call.1} parent=1 // pred_region
      _
    $region13: #{tpu_custom_call.1} parent=1 // pred_fallthru
      _
    %v15 = vld [vmem:[%s0] sm:$0xff]
    %v16 = vlaneseq
    %v17 = vand.u32 %v16, 127
    %v18 = vperm.slane %v15, 0
    %v19 = vlaneseq
    %v20 = vshrl.u32 %v19, 7
    %22 = vset.pattern.permute.xlu0 %v20
    %23 = vperm.xlu0 %22, %v18
    %v24 = vpop.permute.xlu0 %23
    %v25 = vlaneseq
    %v26 = vshrl.u32 %v25, 7
    %v27 = vadd.s32 %v26, 8
    %28 = vset.pattern.permute.xlu0 %v27
    %29 = vperm.xlu0 %28, %v18
    %v30 = vpop.permute.xlu0 %29
    %v31 = vlaneseq
    %v32 = vshrl.u32 %v31, 7
    %v33 = vadd.s32 %v32, 16
    %34 = vset.pattern.permute.xlu0 %v33
    %35 = vperm.xlu0 %34, %v18
    %v36 = vpop.permute.xlu0 %35
    %v37 = vlaneseq
    %v38 = vshrl.u32 %v37, 7
    %v39 = vadd.s32 %v38, 24
    %40 = vset.pattern.permute.xlu0 %v39
    %41 = vperm.xlu0 %40, %v18
    %v42 = vpop.permute.xlu0 %41
    %v43 = vperm.slane %v15, 1
    %v44 = vlaneseq
    %v45 = vshrl.u32 %v44, 7
    %47 = vset.pattern.permute.xlu0 %v45
    %48 = vperm.xlu0 %47, %v43
    %v49 = vpop.permute.xlu0 %48
    %v50 = vlaneseq
    %v51 = vshrl.u32 %v50, 7
    %v52 = vadd.s32 %v51, 8
    %53 = vset.pattern.permute.xlu0 %v52
    %54 = vperm.xlu0 %53, %v43
    %v55 = vpop.permute.xlu0 %54
    %v56 = vlaneseq
    %v57 = vshrl.u32 %v56, 7
    %v58 = vadd.s32 %v57, 16
    %59 = vset.pattern.permute.xlu0 %v58
    %60 = vperm.xlu0 %59, %v43
    %v61 = vpop.permute.xlu0 %60
    %v62 = vlaneseq
    %v63 = vshrl.u32 %v62, 7
    %v64 = vadd.s32 %v63, 24
    %65 = vset.pattern.permute.xlu0 %v64
    %66 = vperm.xlu0 %65, %v43
    %v67 = vpop.permute.xlu0 %66
    %v68 = vperm.slane %v15, 2
    %v69 = vlaneseq
    %v70 = vshrl.u32 %v69, 7
    %72 = vset.pattern.permute.xlu0 %v70
    %73 = vperm.xlu0 %72, %v68
    %v74 = vpop.permute.xlu0 %73
    %v75 = vlaneseq
    %v76 = vshrl.u32 %v75, 7
    %v77 = vadd.s32 %v76, 8
    %78 = vset.pattern.permute.xlu0 %v77
    %79 = vperm.xlu0 %78, %v68
    %v80 = vpop.permute.xlu0 %79
    %v81 = vlaneseq
    %v82 = vshrl.u32 %v81, 7
    %v83 = vadd.s32 %v82, 16
    %84 = vset.pattern.permute.xlu0 %v83
    %85 = vperm.xlu0 %84, %v68
    %v86 = vpop.permute.xlu0 %85
    %v87 = vlaneseq
    %v88 = vshrl.u32 %v87, 7
    %v89 = vadd.s32 %v88, 24
    %90 = vset.pattern.permute.xlu0 %v89
    %91 = vperm.xlu0 %90, %v68
    %v92 = vpop.permute.xlu0 %91
    %v93 = vperm.slane %v15, 3
    %v94 = vlaneseq
    %v95 = vshrl.u32 %v94, 7
    %97 = vset.pattern.permute.xlu0 %v95
    %98 = vperm.xlu0 %97, %v93
    %v99 = vpop.permute.xlu0 %98
    %v100 = vlaneseq
    %v101 = vshrl.u32 %v100, 7
    %v102 = vadd.s32 %v101, 8
    %103 = vset.pattern.permute.xlu0 %v102
    %104 = vperm.xlu0 %103, %v93
    %v105 = vpop.permute.xlu0 %104
    %v106 = vlaneseq
    %v107 = vshrl.u32 %v106, 7
    %v108 = vadd.s32 %v107, 16
    %109 = vset.pattern.permute.xlu0 %v108
    %110 = vperm.xlu0 %109, %v93
    %v111 = vpop.permute.xlu0 %110
    %v112 = vlaneseq
    %v113 = vshrl.u32 %v112, 7
    %v114 = vadd.s32 %v113, 24
    %115 = vset.pattern.permute.xlu0 %v114
    %116 = vperm.xlu0 %115, %v93
    %v117 = vpop.permute.xlu0 %116
    %v118 = vperm.slane %v15, 4
    %v119 = vlaneseq
    %v120 = vshrl.u32 %v119, 7
    %122 = vset.pattern.permute.xlu0 %v120
    %123 = vperm.xlu0 %122, %v118
    %v124 = vpop.permute.xlu0 %123
    %v125 = vlaneseq
    %v126 = vshrl.u32 %v125, 7
    %v127 = vadd.s32 %v126, 8
    %128 = vset.pattern.permute.xlu0 %v127
    %129 = vperm.xlu0 %128, %v118
    %v130 = vpop.permute.xlu0 %129
    %v131 = vlaneseq
    %v132 = vshrl.u32 %v131, 7
    %v133 = vadd.s32 %v132, 16
    %134 = vset.pattern.permute.xlu0 %v133
    %135 = vperm.xlu0 %134, %v118
    %v136 = vpop.permute.xlu0 %135
    %v137 = vlaneseq
    %v138 = vshrl.u32 %v137, 7
    %v139 = vadd.s32 %v138, 24
    %140 = vset.pattern.permute.xlu0 %v139
    %141 = vperm.xlu0 %140, %v118
    %v142 = vpop.permute.xlu0 %141
    %v143 = vperm.slane %v15, 5
    %v144 = vlaneseq
    %v145 = vshrl.u32 %v144, 7
    %147 = vset.pattern.permute.xlu0 %v145
    %148 = vperm.xlu0 %147, %v143
    %v149 = vpop.permute.xlu0 %148
    %v150 = vlaneseq
    %v151 = vshrl.u32 %v150, 7
    %v152 = vadd.s32 %v151, 8
    %153 = vset.pattern.permute.xlu0 %v152
    %154 = vperm.xlu0 %153, %v143
    %v155 = vpop.permute.xlu0 %154
    %v156 = vlaneseq
    %v157 = vshrl.u32 %v156, 7
    %v158 = vadd.s32 %v157, 16
    %159 = vset.pattern.permute.xlu0 %v158
    %160 = vperm.xlu0 %159, %v143
    %v161 = vpop.permute.xlu0 %160
    %v162 = vlaneseq
    %v163 = vshrl.u32 %v162, 7
    %v164 = vadd.s32 %v163, 24
    %165 = vset.pattern.permute.xlu0 %v164
    %166 = vperm.xlu0 %165, %v143
    %v167 = vpop.permute.xlu0 %166
    %v168 = vperm.slane %v15, 6
    %v169 = vlaneseq
    %v170 = vshrl.u32 %v169, 7
    %172 = vset.pattern.permute.xlu0 %v170
    %173 = vperm.xlu0 %172, %v168
    %v174 = vpop.permute.xlu0 %173
    %v175 = vlaneseq
    %v176 = vshrl.u32 %v175, 7
    %v177 = vadd.s32 %v176, 8
    %178 = vset.pattern.permute.xlu0 %v177
    %179 = vperm.xlu0 %178, %v168
    %v180 = vpop.permute.xlu0 %179
    %v181 = vlaneseq
    %v182 = vshrl.u32 %v181, 7
    %v183 = vadd.s32 %v182, 16
    %184 = vset.pattern.permute.xlu0 %v183
    %185 = vperm.xlu0 %184, %v168
    %v186 = vpop.permute.xlu0 %185
    %v187 = vlaneseq
    %v188 = vshrl.u32 %v187, 7
    %v189 = vadd.s32 %v188, 24
    %190 = vset.pattern.permute.xlu0 %v189
    %191 = vperm.xlu0 %190, %v168
    %v192 = vpop.permute.xlu0 %191
    %v193 = vperm.slane %v15, 7
    %v194 = vlaneseq
    %v195 = vshrl.u32 %v194, 7
    %197 = vset.pattern.permute.xlu0 %v195
    %198 = vperm.xlu0 %197, %v193
    %v199 = vpop.permute.xlu0 %198
    %v200 = vlaneseq
    %v201 = vshrl.u32 %v200, 7
    %v202 = vadd.s32 %v201, 8
    %203 = vset.pattern.permute.xlu0 %v202
    %204 = vperm.xlu0 %203, %v193
    %v205 = vpop.permute.xlu0 %204
    %v206 = vlaneseq
    %v207 = vshrl.u32 %v206, 7
    %v208 = vadd.s32 %v207, 16
    %209 = vset.pattern.permute.xlu0 %v208
    %210 = vperm.xlu0 %209, %v193
    %v211 = vpop.permute.xlu0 %210
    %v212 = vlaneseq
    %v213 = vshrl.u32 %v212, 7
    %v214 = vadd.s32 %v213, 24
    %215 = vset.pattern.permute.xlu0 %v214
    %216 = vperm.xlu0 %215, %v193
    %v217 = vpop.permute.xlu0 %216
    %vm218 = vcmp.eq.s32.totalorder %v24, %v17
    %vm219 = vcmp.eq.s32.totalorder %v30, %v17
    %vm220 = vcmp.eq.s32.totalorder %v36, %v17
    %vm221 = vcmp.eq.s32.totalorder %v42, %v17
    %vm222 = vcmp.eq.s32.totalorder %v49, %v17
    %vm223 = vcmp.eq.s32.totalorder %v55, %v17
    %vm224 = vcmp.eq.s32.totalorder %v61, %v17
    %vm225 = vcmp.eq.s32.totalorder %v67, %v17
    %vm226 = vcmp.eq.s32.totalorder %v74, %v17
    %vm227 = vcmp.eq.s32.totalorder %v80, %v17
    %vm228 = vcmp.eq.s32.totalorder %v86, %v17
    %vm229 = vcmp.eq.s32.totalorder %v92, %v17
    %vm230 = vcmp.eq.s32.totalorder %v99, %v17
    %vm231 = vcmp.eq.s32.totalorder %v105, %v17
    %vm232 = vcmp.eq.s32.totalorder %v111, %v17
    %vm233 = vcmp.eq.s32.totalorder %v117, %v17
    %vm234 = vcmp.eq.s32.totalorder %v124, %v17
    %vm235 = vcmp.eq.s32.totalorder %v130, %v17
    %vm236 = vcmp.eq.s32.totalorder %v136, %v17
    %vm237 = vcmp.eq.s32.totalorder %v142, %v17
    %vm238 = vcmp.eq.s32.totalorder %v149, %v17
    %vm239 = vcmp.eq.s32.totalorder %v155, %v17
    %vm240 = vcmp.eq.s32.totalorder %v161, %v17
    %vm241 = vcmp.eq.s32.totalorder %v167, %v17
    %vm242 = vcmp.eq.s32.totalorder %v174, %v17
    %vm243 = vcmp.eq.s32.totalorder %v180, %v17
    %vm244 = vcmp.eq.s32.totalorder %v186, %v17
    %vm245 = vcmp.eq.s32.totalorder %v192, %v17
    %vm246 = vcmp.eq.s32.totalorder %v199, %v17
    %vm247 = vcmp.eq.s32.totalorder %v205, %v17
    %vm248 = vcmp.eq.s32.totalorder %v211, %v17
    %vm249 = vcmp.eq.s32.totalorder %v217, %v17
    %v250 = vsel %vm218, 1.0, 0.0
    %v251 = vsel %vm219, 1.0, 0.0
    %v252 = vsel %vm220, 1.0, 0.0
    %v253 = vsel %vm221, 1.0, 0.0
    %v254 = vsel %vm222, 1.0, 0.0
    %v255 = vsel %vm223, 1.0, 0.0
    %v256 = vsel %vm224, 1.0, 0.0
    %v257 = vsel %vm225, 1.0, 0.0
    %v258 = vsel %vm226, 1.0, 0.0
    %v259 = vsel %vm227, 1.0, 0.0
    %v260 = vsel %vm228, 1.0, 0.0
    %v261 = vsel %vm229, 1.0, 0.0
    %v262 = vsel %vm230, 1.0, 0.0
    %v263 = vsel %vm231, 1.0, 0.0
    %v264 = vsel %vm232, 1.0, 0.0
    %v265 = vsel %vm233, 1.0, 0.0
    %v266 = vsel %vm234, 1.0, 0.0
    %v267 = vsel %vm235, 1.0, 0.0
    %v268 = vsel %vm236, 1.0, 0.0
    %v269 = vsel %vm237, 1.0, 0.0
    %v270 = vsel %vm238, 1.0, 0.0
    %v271 = vsel %vm239, 1.0, 0.0
    %v272 = vsel %vm240, 1.0, 0.0
    %v273 = vsel %vm241, 1.0, 0.0
    %v274 = vsel %vm242, 1.0, 0.0
    %v275 = vsel %vm243, 1.0, 0.0
    %v276 = vsel %vm244, 1.0, 0.0
    %v277 = vsel %vm245, 1.0, 0.0
    %v278 = vsel %vm246, 1.0, 0.0
    %v279 = vsel %vm247, 1.0, 0.0
    %v280 = vsel %vm248, 1.0, 0.0
    %v281 = vsel %vm249, 1.0, 0.0
    %vm282 = vcmask 392192
    %v283 = vsel %vm282, %v250, 0.0
    %v284 = vsel %vm282, %v251, 0.0
    %v285 = vadd.f32 %v283, %v284
    %v286 = vsel %vm282, %v252, 0.0
    %v287 = vadd.f32 %v285, %v286
    %v288 = vsel %vm282, %v253, 0.0
    %v289 = vadd.f32 %v287, %v288
    %v290 = vrot.slane %v289, 4
    %v291 = vadd.f32 %v289, %v290
    %v292 = vrot.slane %v291, 2
    %v293 = vadd.f32 %v291, %v292
    %v294 = vrot.slane %v293, 1
    %v295 = vadd.f32 %v293, %v294
    %v296 = vsel %vm282, %v254, 0.0
    %v297 = vsel %vm282, %v255, 0.0
    %v298 = vadd.f32 %v296, %v297
    %v299 = vsel %vm282, %v256, 0.0
    %v300 = vadd.f32 %v298, %v299
    %v301 = vsel %vm282, %v257, 0.0
    %v302 = vadd.f32 %v300, %v301
    %v303 = vrot.slane %v302, 4
    %v304 = vadd.f32 %v302, %v303
    %v305 = vrot.slane %v304, 2
    %v306 = vadd.f32 %v304, %v305
    %v307 = vrot.slane %v306, 1
    %v308 = vadd.f32 %v306, %v307
    %v309 = vsel %vm282, %v258, 0.0
    %v310 = vsel %vm282, %v259, 0.0
    %v311 = vadd.f32 %v309, %v310
    %v312 = vsel %vm282, %v260, 0.0
    %v313 = vadd.f32 %v311, %v312
    %v314 = vsel %vm282, %v261, 0.0
    %v315 = vadd.f32 %v313, %v314
    %v316 = vrot.slane %v315, 4
    %v317 = vadd.f32 %v315, %v316
    %v318 = vrot.slane %v317, 2
    %v319 = vadd.f32 %v317, %v318
    %v320 = vrot.slane %v319, 1
    %v321 = vadd.f32 %v319, %v320
    %v322 = vsel %vm282, %v262, 0.0
    %v323 = vsel %vm282, %v263, 0.0
    %v324 = vadd.f32 %v322, %v323
    %v325 = vsel %vm282, %v264, 0.0
    %v326 = vadd.f32 %v324, %v325
    %v327 = vsel %vm282, %v265, 0.0
    %v328 = vadd.f32 %v326, %v327
    %v329 = vrot.slane %v328, 4
    %v330 = vadd.f32 %v328, %v329
    %v331 = vrot.slane %v330, 2
    %v332 = vadd.f32 %v330, %v331
    %v333 = vrot.slane %v332, 1
    %v334 = vadd.f32 %v332, %v333
    %v335 = vsel %vm282, %v266, 0.0
    %v336 = vsel %vm282, %v267, 0.0
    %v337 = vadd.f32 %v335, %v336
    %v338 = vsel %vm282, %v268, 0.0
    %v339 = vadd.f32 %v337, %v338
    %v340 = vsel %vm282, %v269, 0.0
    %v341 = vadd.f32 %v339, %v340
    %v342 = vrot.slane %v341, 4
    %v343 = vadd.f32 %v341, %v342
    %v344 = vrot.slane %v343, 2
    %v345 = vadd.f32 %v343, %v344
    %v346 = vrot.slane %v345, 1
    %v347 = vadd.f32 %v345, %v346
    %v348 = vsel %vm282, %v270, 0.0
    %v349 = vsel %vm282, %v271, 0.0
    %v350 = vadd.f32 %v348, %v349
    %v351 = vsel %vm282, %v272, 0.0
    %v352 = vadd.f32 %v350, %v351
    %v353 = vsel %vm282, %v273, 0.0
    %v354 = vadd.f32 %v352, %v353
    %v355 = vrot.slane %v354, 4
    %v356 = vadd.f32 %v354, %v355
    %v357 = vrot.slane %v356, 2
    %v358 = vadd.f32 %v356, %v357
    %v359 = vrot.slane %v358, 1
    %v360 = vadd.f32 %v358, %v359
    %v361 = vsel %vm282, %v274, 0.0
    %v362 = vsel %vm282, %v275, 0.0
    %v363 = vadd.f32 %v361, %v362
    %v364 = vsel %vm282, %v276, 0.0
    %v365 = vadd.f32 %v363, %v364
    %v366 = vsel %vm282, %v277, 0.0
    %v367 = vadd.f32 %v365, %v366
    %v368 = vrot.slane %v367, 4
    %v369 = vadd.f32 %v367, %v368
    %v370 = vrot.slane %v369, 2
    %v371 = vadd.f32 %v369, %v370
    %v372 = vrot.slane %v371, 1
    %v373 = vadd.f32 %v371, %v372
    %v374 = vsel %vm282, %v278, 0.0
    %v375 = vsel %vm282, %v279, 0.0
    %v376 = vadd.f32 %v374, %v375
    %v377 = vsel %vm282, %v280, 0.0
    %v378 = vadd.f32 %v376, %v377
    %v379 = vsel %vm282, %v281, 0.0
    %v380 = vadd.f32 %v378, %v379
    %v381 = vrot.slane %v380, 4
    %v382 = vadd.f32 %v380, %v381
    %v383 = vrot.slane %v382, 2
    %v384 = vadd.f32 %v382, %v383
    %v385 = vrot.slane %v384, 1
    %v386 = vadd.f32 %v384, %v385
    %v387 = vld [vmem:[%s1] sm:$0xff]
    %v388 = vld [vmem:[%s1 + $0x8] sm:$0xff]
    %v389 = vld [vmem:[%s1 + $0x10] sm:$0xff]
    %v390 = vld [vmem:[%s1 + $0x18] sm:$0xff]
    %v391 = vld [vmem:[%s1 + $0x20] sm:$0xff]
    %v392 = vld [vmem:[%s1 + $0x28] sm:$0xff]
    %vm401 = vcmask 1041409
    %v402 = vsel %vm401, %v308, %v295
    %vm403 = vcmask 1042434
    %v404 = vsel %vm403, %v321, %v402
    %vm405 = vcmask 1043459
    %v406 = vsel %vm405, %v334, %v404
    %vm407 = vcmask 1044484
    %v408 = vsel %vm407, %v347, %v406
    %vm409 = vcmask 1045509
    %v410 = vsel %vm409, %v360, %v408
    %vm411 = vcmask 1046534
    %v412 = vsel %vm411, %v373, %v410
    %vm413 = vcmask 1047559
    %v414 = vsel %vm413, %v386, %v412
    %v415 = vsel %vm282, %v414, 0
    %417 = vmatpush.msra.mxu0 0.0
    %418 = vmatpush.msra.mxu0 0.0
    %419 = vmatpush.msra.mxu0 0.0
    %420 = vmatpush.msra.mxu0 0.0
    %421 = vmatpush.msra.mxu0 0.0
    %422 = vmatpush.msra.mxu0 0.0
    %423 = vmatpush.msra.mxu0 0.0
    %424 = vmatpush.msra.mxu0 0.0
    %425 = vmatpush.msra.mxu0 0.0
    %426 = vmatpush.msra.mxu0 0.0
    %427 = vmatpush.msra.mxu0 %v392
    %428 = vmatpush.msra.mxu0 %v391
    %429 = vmatpush.msra.mxu0 %v390
    %430 = vmatpush.msra.mxu0 %v389
    %431 = vmatpush.msra.mxu0 %v388
    %432 = vmatpush.msra.mxu0 %v387
    %433 = vmatmul.f32.gmra.mxu0 %v415
    %v434 = vpop.f32.mrf.mxu0
    %v435 = vadd.f32 0.0, %v434
    %436 = vdwg.mxu0
    %v437 = vmax.f32 %v435, 0.0
    %v438 = vld [vmem:[%s2] sm:$0x1]
    %v440 = vperm.slane %v438, 0
    %v442 = vmul.f32 %v437, %v440
    %vm443 = vcmask 261120
    %v444 = vsel %vm443, %v442, 0.0
    %445 = vadd.xlane.f32.xlu0 %v444
    %v446 = vpop.xlane.xlu0 %445
    %447 = vst [vmem:[#allocation2] sm:$0xff] %v446
    // Predicated region
    $region14: #{tpu_custom_call.1} parent=1 // pred_check
      _
    $region15: #{tpu_custom_call.1} parent=1 // pred_check_branch
      %449 = sbr.rel (0) target = $region17
    $region16: #{tpu_custom_call.1} parent=1 // pred_region
      %451 = vsyncadd [#allocation3], 0
      %s453 = sshll.u32 [#allocation2], 4
      %s454 = int_to_ptr.vmem [resolvable:$true] %s453
      %s455 = sshll.u32 %s3, 4
      %s456 = int_to_ptr.hbm [resolvable:$true] %s455
      %458 = dma.vmem_to_hbm [thread:$0]  %s454, 128, %s456, [#allocation3]
    $region17: #{tpu_custom_call.1} parent=1 // pred_fallthru
      _
    // Predicated region
    $region18: #{tpu_custom_call.1} parent=1 // pred_check
      _
    $region19: #{tpu_custom_call.1} parent=1 // pred_check_branch
      %460 = sbr.rel (0) target = $region21
    $region20: #{tpu_custom_call.1} parent=1 // pred_region
      %462 = dma.done [#allocation3], 128
    $region21: #{tpu_custom_call.1} parent=1 // pred_fallthru
      _
    %463 = vsyncpa [#allocation3], 1

</llo_original>
